<compile_context>
chip_gen: v5e
topology: v5e:2x2
jax: 0.10.0
libtpu: 0.0.40
codegen_flags: <defaults>
</compile_context>

<pallas_src>
import jax
import jax.numpy as jnp
from jax.experimental import pallas as pl
from jax.experimental.pallas import tpu as pltpu


def _sheaf_kernel(srT_ref, scT_ref, wr_ref, wc_ref, o_ref):
    # srT_ref, scT_ref : (H, TILE_E)  -- lane-dense inputs (E in lanes)
    # wr_ref,  wc_ref  : (O, H)       -- resident across the grid (same block index)
    # o_ref            : (O, TILE_E)  -- lane-dense output
    y = jnp.dot(wr_ref[...], srT_ref[...], preferred_element_type=jnp.float32)
    y = y + jnp.dot(wc_ref[...], scT_ref[...], preferred_element_type=jnp.float32)
    o_ref[...] = jnp.tanh(y)


def _round_up(n, m):
    return ((n + m - 1) // m) * m


def local_concat_sheaf_learner_variant(x, edge_index, weight, *, d, out_shape,
                                       tile_e=1024):
    """JAX/Pallas equivalent of LocalConcatSheafLearnerVariant.forward (sheaf_act='tanh')."""
    x = x.astype(jnp.float32)
    weight = weight.astype(jnp.float32)
    H = x.shape[1]
    O = weight.shape[0]
    assert weight.shape[1] == 2 * H

    row, col = edge_index[0], edge_index[1]
    assert row.shape[0] % d == 0
    E = row.shape[0] // d

    # Gather + d-reduction (fused by XLA); the concat is eliminated algebraically.
    s_row = jnp.take(x, row, axis=0).reshape(E, d, H).sum(axis=1)   # (E, H)
    s_col = jnp.take(x, col, axis=0).reshape(E, d, H).sum(axis=1)   # (E, H)

    # Lane-dense layout: put E in the 128-lane dimension.
    s_rowT = s_row.T                                                # (H, E)
    s_colT = s_col.T                                                # (H, E)

    # Tile E (multiple of 128, modest enough for v5e's 16 MiB scoped VMEM) and
    # zero-pad the remainder; padded columns produce tanh(0)=0 and are sliced off.
    tile = min(tile_e, _round_up(max(E, 1), 128))
    E_pad = _round_up(E, tile)
    if E_pad != E:
        pad = ((0, 0), (0, E_pad - E))
        s_rowT = jnp.pad(s_rowT, pad)
        s_colT = jnp.pad(s_colT, pad)

    w_row = weight[:, :H]                                           # (O, H)
    w_col = weight[:, H:]                                           # (O, H)

    grid = (E_pad // tile,)

    cost = pl.CostEstimate(
        flops=2 * (2 * E_pad * H * O),                 # two (O,H)x(H,E) matmuls
        transcendentals=E_pad * O,                     # tanh epilogue
        bytes_accessed=4 * (2 * E_pad * H + 2 * O * H + E_pad * O),
    )

    out_T = pl.pallas_call(
        _sheaf_kernel,
        out_shape=jax.ShapeDtypeStruct((O, E_pad), jnp.float32),
        grid_spec=pltpu.PrefetchScalarGridSpec(
            num_scalar_prefetch=0,
            grid=grid,
            in_specs=[
                pl.BlockSpec((H, tile), lambda i: (0, i)),   # s_rowT tile
                pl.BlockSpec((H, tile), lambda i: (0, i)),   # s_colT tile
                pl.BlockSpec((O, H), lambda i: (0, 0)),      # W_row (pinned)
                pl.BlockSpec((O, H), lambda i: (0, 0)),      # W_col (pinned)
            ],
            out_specs=pl.BlockSpec((O, tile), lambda i: (0, i)),
        ),
        compiler_params=pltpu.CompilerParams(
            dimension_semantics=("parallel",),  # megacore sharding on v7x
        ),
        cost_estimate=cost,
    )(s_rowT, s_colT, w_row, w_col)

    maps = out_T[:, :E].T                                           # (E, O)
    return maps.reshape((E,) + tuple(out_shape))


if __name__ == "__main__":
    key = jax.random.PRNGKey(0)
    d = 2
    hidden_channels = 32
    out_shape = (2, 2)          # prod = 4 -> maps reshaped to (E, 2, 2)
    n_nodes = 16
    n_edges = 8                 # edge_index length = n_edges * d

    k1, k2, k3 = jax.random.split(key, 3)
    x = jax.random.normal(k1, (n_nodes, hidden_channels), dtype=jnp.float32)
    edge_index = jax.random.randint(k2, (2, n_edges * d), 0, n_nodes, dtype=jnp.int32)

    # Deterministic Linear weight (PyTorch default init: U(-1/sqrt(fan_in), 1/sqrt(fan_in)))
    fan_in = 2 * hidden_channels
    bound = 1.0 / float(fan_in) ** 0.5
    weight = jax.random.uniform(
        k3, (out_shape[0] * out_shape[1], 2 * hidden_channels),
        minval=-bound, maxval=bound, dtype=jnp.float32)

    maps = local_concat_sheaf_learner_variant(
        x, edge_index, weight, d=d, out_shape=out_shape)
    maps = jax.block_until_ready(maps)

    # Pure-JAX reference (same f32 math) for a correctness check.
    row, col = edge_index[0], edge_index[1]
    ref = jnp.concatenate([x[row], x[col]], axis=-1)
    ref = ref.reshape(-1, d, 2 * hidden_channels).sum(axis=1)
    ref = jnp.tanh(ref @ weight.T).reshape(-1, out_shape[0], out_shape[1])
    assert maps.shape == (n_edges, out_shape[0], out_shape[1])
    assert jnp.allclose(maps, ref, atol=1e-5, rtol=1e-5)

    print("KERNEL_OK")
</pallas_src>

<mosaic_0001>
module attributes {stable_mosaic.version = 11 : i64} {
  func.func @_sheaf_kernel(%arg0: i32, %arg1: memref<32x128xf32, #tpu.memory_space<vmem>>, %arg2: memref<32x128xf32, #tpu.memory_space<vmem>>, %arg3: memref<4x32xf32, #tpu.memory_space<vmem>>, %arg4: memref<4x32xf32, #tpu.memory_space<vmem>>, %arg5: memref<4x128xf32, #tpu.memory_space<vmem>>) attributes {dimension_semantics = [#tpu.dimension_semantics<parallel>], iteration_bounds = array<i64: 1>, scalar_prefetch = 0 : i64, scratch_operands = 0 : i64, tpu.core_type = #tpu.core_type<tc>, window_params = [{transform_indices = @transform_0, window_bounds = array<i64: 32, 128>}, {transform_indices = @transform_1, window_bounds = array<i64: 32, 128>}, {pipeline_mode = #tpu.pipeline_mode<synchronous>, transform_indices = @transform_2, window_bounds = array<i64: 4, 32>}, {pipeline_mode = #tpu.pipeline_mode<synchronous>, transform_indices = @transform_3, window_bounds = array<i64: 4, 32>}, {transform_indices = @transform_4, window_bounds = array<i64: 4, 128>}]} {
    %c0 = arith.constant 0 : index
    %c0_0 = arith.constant 0 : index
    %0 = vector.load %arg3[%c0, %c0_0] : memref<4x32xf32, #tpu.memory_space<vmem>>, vector<4x32xf32>
    %c0_1 = arith.constant 0 : index
    %c0_2 = arith.constant 0 : index
    %1 = vector.load %arg1[%c0_1, %c0_2] : memref<32x128xf32, #tpu.memory_space<vmem>>, vector<32x128xf32>
    %cst = arith.constant dense<0.000000e+00> : vector<4x128xf32>
    %2 = tpu.matmul %0, %1, %cst {dimension_numbers = #tpu.dot_dimension_numbers<[1], [0], [0], [1], [0, 0, 1, 1], [], []>} : vector<4x32xf32>, vector<32x128xf32>, vector<4x128xf32> -> vector<4x128xf32>
    %c0_3 = arith.constant 0 : index
    %c0_4 = arith.constant 0 : index
    %3 = vector.load %arg4[%c0_3, %c0_4] : memref<4x32xf32, #tpu.memory_space<vmem>>, vector<4x32xf32>
    %c0_5 = arith.constant 0 : index
    %c0_6 = arith.constant 0 : index
    %4 = vector.load %arg2[%c0_5, %c0_6] : memref<32x128xf32, #tpu.memory_space<vmem>>, vector<32x128xf32>
    %cst_7 = arith.constant dense<0.000000e+00> : vector<4x128xf32>
    %5 = tpu.matmul %3, %4, %cst_7 {dimension_numbers = #tpu.dot_dimension_numbers<[1], [0], [0], [1], [0, 0, 1, 1], [], []>} : vector<4x32xf32>, vector<32x128xf32>, vector<4x128xf32> -> vector<4x128xf32>
    %6 = arith.addf %2, %5 : vector<4x128xf32>
    %7 = math.tanh %6 : vector<4x128xf32>
    %c0_8 = arith.constant 0 : index
    %c0_9 = arith.constant 0 : index
    %8 = vector.load %arg5[%c0_8, %c0_9] : memref<4x128xf32, #tpu.memory_space<vmem>>, vector<4x128xf32>
    tpu.vector_store %arg5[%c0_8, %c0_9], %7 {strides = array<i32>} : memref<4x128xf32, #tpu.memory_space<vmem>>, vector<4x128xf32>,
    return
  }
  func.func @transform_0(%arg0: i32) -> (i32, i32) {
    %c0_i32 = arith.constant 0 : i32
    %c0_i32_0 = arith.constant 0 : i32
    return %c0_i32, %arg0 : i32, i32
  }
  func.func @transform_1(%arg0: i32) -> (i32, i32) {
    %c0_i32 = arith.constant 0 : i32
    %c0_i32_0 = arith.constant 0 : i32
    return %c0_i32, %arg0 : i32, i32
  }
  func.func @transform_2(%arg0: i32) -> (i32, i32) {
    %c0_i32 = arith.constant 0 : i32
    %c0_i32_0 = arith.constant 0 : i32
    %c0_i32_1 = arith.constant 0 : i32
    return %c0_i32, %c0_i32_0 : i32, i32
  }
  func.func @transform_3(%arg0: i32) -> (i32, i32) {
    %c0_i32 = arith.constant 0 : i32
    %c0_i32_0 = arith.constant 0 : i32
    %c0_i32_1 = arith.constant 0 : i32
    return %c0_i32, %c0_i32_0 : i32, i32
  }
  func.func @transform_4(%arg0: i32) -> (i32, i32) {
    %c0_i32 = arith.constant 0 : i32
    %c0_i32_0 = arith.constant 0 : i32
    return %c0_i32, %arg0 : i32, i32
  }
}

</mosaic_0001>

<llo_original>
// kernel: tpu_custom_call.1
$region0: #{tpu_custom_call.1}
  #allocation0 [shape = 'u32[]', space=smem, size = 0x4, offset = 0x4, fixed_abs, tag = 'smem constant byte address 0x4 - core index']
  #allocation1 [shape = 'u32[72,128]{1,0:T(1,128)}', space=vmem, size = 0x9000, scoped, tag = 'internal scratch']
  %s0 = inlined_call_operand.hbm [shape: f32[32,128], index: 0, kind: input, shape index: {}]
  %s1 = inlined_call_operand.hbm [shape: f32[32,128], index: 1, kind: input, shape index: {}]
  %s2 = inlined_call_operand.hbm [shape: f32[4,32], index: 2, kind: input, shape index: {}]
  %s3 = inlined_call_operand.hbm [shape: f32[4,32], index: 3, kind: input, shape index: {}]
  %s4 = inlined_call_operand.hbm [shape: f32[4,128], index: 4, kind: output, shape index: {}]
  %s5 = sld [smem:[#allocation0]]
  $region42: #{tpu_custom_call.1} parent=0
    _
  %s7 = ssub.s32 1, %s5
  %s8 = scalar_select 0, %s7, %s5
  $region1: #{tpu_custom_call.1} parent=0
    #allocation2 [shape = 'u8[16384]{0}', space=vmem, size = 0x4000, scoped, tag = 'input window, operand 0, single buffered']
    #allocation3 [shape = 's32[1]{0}', space=sflag, size = 0x4, scoped, tag = 'scoped memory for tpu_custom_call.1']
    #allocation4 [shape = 's32[1]{0}', space=sflag, size = 0x4, scoped, tag = 'scoped memory for tpu_custom_call.1']
    #allocation5 [shape = 'u8[16384]{0}', space=vmem, size = 0x4000, scoped, tag = 'input window, operand 1, single buffered']
    #allocation6 [shape = 's32[1]{0}', space=sflag, size = 0x4, scoped, tag = 'scoped memory for tpu_custom_call.1']
    #allocation7 [shape = 'u8[2048]{0}', space=vmem, size = 0x800, scoped, tag = 'input window, operand 2, single buffered']
    #allocation8 [shape = 'u8[2048]{0}', space=vmem, size = 0x800, scoped, tag = 'input window, operand 3, single buffered']
    #allocation9 [shape = 's32[1]{0}', space=sflag, size = 0x4, scoped, tag = 'scoped memory for tpu_custom_call.1']
    #allocation10 [shape = 'u8[2048]{0}', space=vmem, size = 0x800, scoped, tag = 'output window, operand 0, single buffered']
    %9 = vsyncpa [#allocation3], 0
    %10 = vsyncpa [#allocation6], 0
    %11 = vsyncpa [#allocation9], 0
    %12 = vsyncpa [#allocation4], 0
    // Predicated region
    $region2: #{tpu_custom_call.1} parent=1 // pred_check
      _
    $region3: #{tpu_custom_call.1} parent=1 // pred_check_branch
      %14 = sbr.rel (0) target = $region5
    $region4: #{tpu_custom_call.1} parent=1 // pred_region
      %16 = vsyncadd [#allocation3], 0
      %s17 = sshll.u32 %s0, 4
      %s18 = int_to_ptr.hbm [resolvable:$true] %s17
      %s19 = sshll.u32 [#allocation2], 4
      %s20 = int_to_ptr.vmem [resolvable:$true] %s19
      %25 = dma.hbm_to_vmem [thread:$0]  %s18, 512, %s20, [#allocation3], 128, 128, 8
    $region5: #{tpu_custom_call.1} parent=1 // pred_fallthru
      _
    // Predicated region
    $region6: #{tpu_custom_call.1} parent=1 // pred_check
      _
    $region7: #{tpu_custom_call.1} parent=1 // pred_check_branch
      %27 = sbr.rel (0) target = $region9
    $region8: #{tpu_custom_call.1} parent=1 // pred_region
      %29 = vsyncadd [#allocation6], 0
      %s30 = sshll.u32 %s1, 4
      %s31 = int_to_ptr.hbm [resolvable:$true] %s30
      %s32 = sshll.u32 [#allocation5], 4
      %s33 = int_to_ptr.vmem [resolvable:$true] %s32
      %38 = dma.hbm_to_vmem [thread:$0]  %s31, 512, %s33, [#allocation6], 128, 128, 8
    $region9: #{tpu_custom_call.1} parent=1 // pred_fallthru
      _
    // Predicated region
    $region10: #{tpu_custom_call.1} parent=1 // pred_check
      _
    $region11: #{tpu_custom_call.1} parent=1 // pred_check_branch
      %40 = sbr.rel (0) target = $region13
    $region12: #{tpu_custom_call.1} parent=1 // pred_region
      %42 = vsyncadd [#allocation6], 0
      %s44 = sshll.u32 %s2, 4
      %s45 = int_to_ptr.hbm [resolvable:$true] %s44
      %s46 = sshll.u32 [#allocation7], 4
      %s47 = int_to_ptr.vmem [resolvable:$true] %s46
      %49 = dma.hbm_to_vmem [thread:$0]  %s45, 64, %s47, [#allocation6]
    $region13: #{tpu_custom_call.1} parent=1 // pred_fallthru
      _
    // Predicated region
    $region14: #{tpu_custom_call.1} parent=1 // pred_check
      _
    $region15: #{tpu_custom_call.1} parent=1 // pred_check_branch
      %51 = sbr.rel (0) target = $region17
    $region16: #{tpu_custom_call.1} parent=1 // pred_region
      %53 = vsyncadd [#allocation9], 0
      %s55 = sshll.u32 %s3, 4
      %s56 = int_to_ptr.hbm [resolvable:$true] %s55
      %s57 = sshll.u32 [#allocation8], 4
      %s58 = int_to_ptr.vmem [resolvable:$true] %s57
      %60 = dma.hbm_to_vmem [thread:$0]  %s56, 64, %s58, [#allocation9]
    $region17: #{tpu_custom_call.1} parent=1 // pred_fallthru
      _
    // Predicated region
    $region18: #{tpu_custom_call.1} parent=1 // pred_check
      _
    $region19: #{tpu_custom_call.1} parent=1 // pred_check_branch
      %62 = sbr.rel (0) target = $region21
    $region20: #{tpu_custom_call.1} parent=1 // pred_region
      %64 = dma.done [#allocation3], 512
    $region21: #{tpu_custom_call.1} parent=1 // pred_fallthru
      _
    // Predicated region
    $region22: #{tpu_custom_call.1} parent=1 // pred_check
      _
    $region23: #{tpu_custom_call.1} parent=1 // pred_check_branch
      %66 = sbr.rel (0) target = $region25
    $region24: #{tpu_custom_call.1} parent=1 // pred_region
      %68 = dma.done [#allocation6], 512
    $region25: #{tpu_custom_call.1} parent=1 // pred_fallthru
      _
    // Predicated region
    $region26: #{tpu_custom_call.1} parent=1 // pred_check
      _
    $region27: #{tpu_custom_call.1} parent=1 // pred_check_branch
      %70 = sbr.rel (0) target = $region29
    $region28: #{tpu_custom_call.1} parent=1 // pred_region
      %72 = dma.done [#allocation6], 64
    $region29: #{tpu_custom_call.1} parent=1 // pred_fallthru
      _
    // Predicated region
    $region30: #{tpu_custom_call.1} parent=1 // pred_check
      _
    $region31: #{tpu_custom_call.1} parent=1 // pred_check_branch
      %74 = sbr.rel (0) target = $region33
    $region32: #{tpu_custom_call.1} parent=1 // pred_region
      %76 = dma.done [#allocation9], 64
    $region33: #{tpu_custom_call.1} parent=1 // pred_fallthru
      _
    %v77 = vld [vmem:[#allocation7] sm:$0xf]
    %v78 = vld [vmem:[#allocation2] sm:$0xff]
    %v79 = vld [vmem:[#allocation2 + $0x8] sm:$0xff]
    %v80 = vld [vmem:[#allocation2 + $0x10] sm:$0xff]
    %v81 = vld [vmem:[#allocation2 + $0x18] sm:$0xff]
    %v82 = vld [vmem:[#allocation8] sm:$0xf]
    %v83 = vld [vmem:[#allocation5] sm:$0xff]
    %v84 = vld [vmem:[#allocation5 + $0x8] sm:$0xff]
    %v85 = vld [vmem:[#allocation5 + $0x10] sm:$0xff]
    %v86 = vld [vmem:[#allocation5 + $0x18] sm:$0xff]
    %vm87 = vcmask 261120
    %v89 = vsel %vm87, %v82, 0
    %91 = vmatpush.msra.mxu0 0.0
    %92 = vmatpush.msra.mxu0 0.0
    %93 = vmatpush.msra.mxu0 0.0
    %94 = vmatpush.msra.mxu0 0.0
    %95 = vmatpush.msra.mxu0 0.0
    %96 = vmatpush.msra.mxu0 0.0
    %97 = vmatpush.msra.mxu0 0.0
    %98 = vmatpush.msra.mxu0 0.0
    %99 = vmatpush.msra.mxu0 0.0
    %100 = vmatpush.msra.mxu0 0.0
    %101 = vmatpush.msra.mxu0 0.0
    %102 = vmatpush.msra.mxu0 0.0
    %103 = vmatpush.msra.mxu0 %v86
    %104 = vmatpush.msra.mxu0 %v85
    %105 = vmatpush.msra.mxu0 %v84
    %106 = vmatpush.msra.mxu0 %v83
    %107 = vmatmul.f32.gmra.mxu0 %v89
    %v108 = vpop.f32.mrf.mxu0
    %v109 = vadd.f32 0.0, %v108
    %110 = vdwg.mxu0
    %v112 = vsel %vm87, %v77, 0
    %114 = vmatpush.msra.mxu0 0.0
    %115 = vmatpush.msra.mxu0 0.0
    %116 = vmatpush.msra.mxu0 0.0
    %117 = vmatpush.msra.mxu0 0.0
    %118 = vmatpush.msra.mxu0 0.0
    %119 = vmatpush.msra.mxu0 0.0
    %120 = vmatpush.msra.mxu0 0.0
    %121 = vmatpush.msra.mxu0 0.0
    %122 = vmatpush.msra.mxu0 0.0
    %123 = vmatpush.msra.mxu0 0.0
    %124 = vmatpush.msra.mxu0 0.0
    %125 = vmatpush.msra.mxu0 0.0
    %126 = vmatpush.msra.mxu0 %v81
    %127 = vmatpush.msra.mxu0 %v80
    %128 = vmatpush.msra.mxu0 %v79
    %129 = vmatpush.msra.mxu0 %v78
    %130 = vmatmul.f32.gmra.mxu0 %v112
    %v131 = vpop.f32.mrf.mxu0
    %v132 = vadd.f32 %v109, %v131
    %133 = vdwg.mxu0
    %v134 = vtanh.pop %v132
    %135 = vst [vmem:[#allocation10] sm:$0xf] %v134
    // Predicated region
    $region34: #{tpu_custom_call.1} parent=1 // pred_check
      _
    $region35: #{tpu_custom_call.1} parent=1 // pred_check_branch
      %137 = sbr.rel (0) target = $region37
    $region36: #{tpu_custom_call.1} parent=1 // pred_region
      %139 = vsyncadd [#allocation4], 0
      %s141 = sshll.u32 [#allocation10], 4
      %s142 = int_to_ptr.vmem [resolvable:$true] %s141
      %s143 = sshll.u32 %s4, 4
      %s144 = int_to_ptr.hbm [resolvable:$true] %s143
      %146 = dma.vmem_to_hbm [thread:$0]  %s142, 64, %s144, [#allocation4]
    $region37: #{tpu_custom_call.1} parent=1 // pred_fallthru
      _
    // Predicated region
    $region38: #{tpu_custom_call.1} parent=1 // pred_check
      _
    $region39: #{tpu_custom_call.1} parent=1 // pred_check_branch
      %148 = sbr.rel (0) target = $region41
    $region40: #{tpu_custom_call.1} parent=1 // pred_region
      %150 = dma.done [#allocation4], 64
    $region41: #{tpu_custom_call.1} parent=1 // pred_fallthru
      _
    %151 = vsyncpa [#allocation3], 1
    %152 = vsyncpa [#allocation6], 1
    %153 = vsyncpa [#allocation9], 1
    %154 = vsyncpa [#allocation4], 1

</llo_original>
